<compile_context>
chip_gen: v7x
topology: tpu7x:2x2x1
jax: 0.10.0
libtpu: 0.0.40
codegen_flags: <defaults>
</compile_context>

<pallas_src>
import jax
import jax.numpy as jnp
from jax.experimental import pallas as pl
from jax.experimental.pallas import tpu as pltpu

# ----------------------------- model config ---------------------------------
NB, C_IN, H, W = 2, 4, 16, 16    # input (NCHW)
K = 3                            # encoder conv kernel
C_HID = 32                       # encoder / decoder channels
NUM_CLASSES = 10
HW = H * W
M_ROWS = NB * HW                 # flattened (n, y, x) rows
PATCH = K * K * C_IN             # im2col contraction dim (36)


# ------------------------------ Pallas kernel -------------------------------
def framer_kernel(p_ref, w_enc_ref, b_enc_ref,
                  w_dec_ref, b_dec_ref,
                  w_head_ref, b_head_ref,
                  out_ref):
    # ---- encoder: 3x3 "same" conv as ONE im2col MXU matmul -------------------
    feat = jnp.dot(p_ref[...], w_enc_ref[...],
                   preferred_element_type=jnp.float32)             # (M, C_HID)
    feat = jnp.maximum(feat + b_enc_ref[...], 0.0)

    # ---- decoder: 1x1 conv == channel matmul + bias + ReLU -------------------
    feat = jnp.dot(feat, w_dec_ref[...],
                   preferred_element_type=jnp.float32) + b_dec_ref[...]
    feat = jnp.maximum(feat, 0.0)                                   # (M, C_HID)

    # ---- head.predict: global average pool + linear --------------------------
    # 1/HW scale is folded into w_head, so a plain sum suffices here.
    pooled = jnp.sum(feat.reshape(NB, HW, C_HID), axis=1)           # (NB, C_HID)
    out_ref[...] = (jnp.dot(pooled, w_head_ref[...],
                            preferred_element_type=jnp.float32)
                    + b_head_ref[...])                              # (NB, 10)


# ----------------------- one-time parameter preparation ----------------------
def prepare_params(w_enc, b_enc, w_dec, b_dec, w_head, b_head):
    """Hoisted out of the forward path: re-layout weights once."""
    f32 = jnp.float32
    # (O, I, kh, kw) -> (kh, kw, I, O) -> (kh*kw*I, O); column order (ky, kx, c)
    # with c fastest, matching the im2col patch column order built in forward().
    w_enc_m = jnp.transpose(w_enc, (2, 3, 1, 0)).reshape(PATCH, C_HID)
    b_enc2 = b_enc.reshape(1, C_HID)
    # 1x1 conv: (O, I, 1, 1) -> (I, O)
    w_dec_m = w_dec.reshape(C_HID, C_HID).T
    b_dec2 = b_dec.reshape(1, C_HID)
    # Head: fold the 1/HW mean-pool scale into the weight (review item 5).
    w_head_m = (w_head.T / HW)                                      # (C_HID, 10)
    b_head2 = b_head.reshape(1, NUM_CLASSES)
    return (w_enc_m.astype(f32), b_enc2.astype(f32),
            w_dec_m.astype(f32), b_dec2.astype(f32),
            w_head_m.astype(f32), b_head2.astype(f32))


# --------------------------------- forward -----------------------------------
@jax.jit
def model_framer_forward(x_nchw, params):
    w_enc_m, b_enc2, w_dec_m, b_dec2, w_head_m, b_head2 = params

    # im2col with a true 2D zero halo (no masks anywhere downstream).
    # transpose + pad + static window slices + concat fuse into one XLA fusion
    # producing the single (M_ROWS, 36) operand of the kernel's encoder dot.
    x_nhwc = jnp.transpose(x_nchw, (0, 2, 3, 1)).astype(jnp.float32)   # (N,H,W,C)
    xh = jnp.pad(x_nhwc, ((0, 0), (1, 1), (1, 1), (0, 0)))             # (N,H+2,W+2,C)
    taps = [xh[:, oy:oy + H, ox:ox + W, :]
            for oy in range(K) for ox in range(K)]                     # 9 x (N,H,W,C)
    patches = jnp.concatenate(taps, axis=-1).reshape(M_ROWS, PATCH)    # (M, 36)

    vmem = pl.BlockSpec(memory_space=pltpu.MemorySpace.VMEM)
    out = pl.pallas_call(
        framer_kernel,
        out_shape=jax.ShapeDtypeStruct((NB, NUM_CLASSES), jnp.float32),
        in_specs=[vmem] * 7,
        out_specs=vmem,
    )(patches, w_enc_m, b_enc2, w_dec_m, b_dec2, w_head_m, b_head2)

    return out                                                         # (NB, 10)


# ------------------------- pure-JAX reference (check) ------------------------
def reference_forward(x, w_enc, b_enc, w_dec, b_dec, w_head, b_head):
    feat = jax.lax.conv_general_dilated(
        x, w_enc, window_strides=(1, 1), padding="SAME",
        dimension_numbers=("NCHW", "OIHW", "NCHW"))
    feat = jax.nn.relu(feat + b_enc[None, :, None, None])
    feat = jax.lax.conv_general_dilated(
        feat, w_dec, window_strides=(1, 1), padding="SAME",
        dimension_numbers=("NCHW", "OIHW", "NCHW"))
    feat = jax.nn.relu(feat + b_dec[None, :, None, None])
    pooled = feat.mean(axis=(2, 3))                                    # (NB, C_HID)
    return pooled @ w_head.T + b_head


# ---------------------------------- main -------------------------------------
if __name__ == "__main__":
    key = jax.random.PRNGKey(0)
    kx, k1, k2, k3, k4, k5, k6 = jax.random.split(key, 7)

    x = jax.random.normal(kx, (NB, C_IN, H, W), dtype=jnp.float32)

    # deterministic synthetic parameters (shapes follow the PyTorch module init)
    w_enc = 0.1 * jax.random.normal(k1, (C_HID, C_IN, K, K), dtype=jnp.float32)
    b_enc = 0.1 * jax.random.normal(k2, (C_HID,), dtype=jnp.float32)
    w_dec = 0.1 * jax.random.normal(k3, (C_HID, C_HID, 1, 1), dtype=jnp.float32)
    b_dec = 0.1 * jax.random.normal(k4, (C_HID,), dtype=jnp.float32)
    w_head = 0.1 * jax.random.normal(k5, (NUM_CLASSES, C_HID), dtype=jnp.float32)
    b_head = 0.1 * jax.random.normal(k6, (NUM_CLASSES,), dtype=jnp.float32)

    params = prepare_params(w_enc, b_enc, w_dec, b_dec, w_head, b_head)
    params = jax.tree_util.tree_map(jax.block_until_ready, params)

    logits = model_framer_forward(x, params)
    jax.block_until_ready(logits)

    ref = reference_forward(x, w_enc, b_enc, w_dec, b_dec, w_head, b_head)
    assert logits.shape == (NB, NUM_CLASSES)
    assert jnp.allclose(logits, ref, atol=1e-4, rtol=1e-4), "mismatch vs reference"

    print("KERNEL_OK")
</pallas_src>

<mosaic_0001>
module attributes {stable_mosaic.version = 11 : i64} {
  func.func @framer_kernel(%arg0: memref<512x36xf32, #tpu.memory_space<vmem>>, %arg1: memref<36x32xf32, #tpu.memory_space<vmem>>, %arg2: memref<1x32xf32, #tpu.memory_space<vmem>>, %arg3: memref<32x32xf32, #tpu.memory_space<vmem>>, %arg4: memref<1x32xf32, #tpu.memory_space<vmem>>, %arg5: memref<32x10xf32, #tpu.memory_space<vmem>>, %arg6: memref<1x10xf32, #tpu.memory_space<vmem>>, %arg7: memref<2x10xf32, #tpu.memory_space<vmem>>) attributes {dimension_semantics = [], scalar_prefetch = 0 : i64, scratch_operands = 0 : i64, tpu.core_type = #tpu.core_type<tc>} {
    %c0 = arith.constant 0 : index
    %c0_0 = arith.constant 0 : index
    %0 = vector.load %arg0[%c0, %c0_0] : memref<512x36xf32, #tpu.memory_space<vmem>>, vector<512x36xf32>
    %c0_1 = arith.constant 0 : index
    %c0_2 = arith.constant 0 : index
    %1 = vector.load %arg1[%c0_1, %c0_2] : memref<36x32xf32, #tpu.memory_space<vmem>>, vector<36x32xf32>
    %cst = arith.constant dense<0.000000e+00> : vector<512x32xf32>
    %2 = tpu.matmul %0, %1, %cst {dimension_numbers = #tpu.dot_dimension_numbers<[1], [0], [0], [1], [0, 0, 1, 1], [], []>} : vector<512x36xf32>, vector<36x32xf32>, vector<512x32xf32> -> vector<512x32xf32>
    %c0_3 = arith.constant 0 : index
    %c0_4 = arith.constant 0 : index
    %3 = vector.load %arg2[%c0_3, %c0_4] : memref<1x32xf32, #tpu.memory_space<vmem>>, vector<1x32xf32>
    %4 = vector.broadcast %3 : vector<1x32xf32> to vector<512x32xf32>
    %5 = arith.addf %2, %4 : vector<512x32xf32>
    %cst_5 = arith.constant 0.000000e+00 : f32
    %6 = vector.broadcast %cst_5 : f32 to vector<512x32xf32>
    %7 = arith.maximumf %5, %6 : vector<512x32xf32>
    %c0_6 = arith.constant 0 : index
    %c0_7 = arith.constant 0 : index
    %8 = vector.load %arg3[%c0_6, %c0_7] : memref<32x32xf32, #tpu.memory_space<vmem>>, vector<32x32xf32>
    %cst_8 = arith.constant dense<0.000000e+00> : vector<512x32xf32>
    %9 = tpu.matmul %7, %8, %cst_8 {dimension_numbers = #tpu.dot_dimension_numbers<[1], [0], [0], [1], [0, 0, 1, 1], [], []>} : vector<512x32xf32>, vector<32x32xf32>, vector<512x32xf32> -> vector<512x32xf32>
    %c0_9 = arith.constant 0 : index
    %c0_10 = arith.constant 0 : index
    %10 = vector.load %arg4[%c0_9, %c0_10] : memref<1x32xf32, #tpu.memory_space<vmem>>, vector<1x32xf32>
    %11 = vector.broadcast %10 : vector<1x32xf32> to vector<512x32xf32>
    %12 = arith.addf %9, %11 : vector<512x32xf32>
    %cst_11 = arith.constant 0.000000e+00 : f32
    %13 = vector.broadcast %cst_11 : f32 to vector<512x32xf32>
    %14 = arith.maximumf %12, %13 : vector<512x32xf32>
    %15 = vector.shape_cast %14 : vector<512x32xf32> to vector<2x256x32xf32>
    %cst_12 = arith.constant dense<0.000000e+00> : vector<2x32xf32>
    %16 = vector.multi_reduction <add>, %15, %cst_12 [1] : vector<2x256x32xf32> to vector<2x32xf32>
    %c0_13 = arith.constant 0 : index
    %c0_14 = arith.constant 0 : index
    %17 = vector.load %arg5[%c0_13, %c0_14] : memref<32x10xf32, #tpu.memory_space<vmem>>, vector<32x10xf32>
    %cst_15 = arith.constant dense<0.000000e+00> : vector<2x10xf32>
    %18 = tpu.matmul %16, %17, %cst_15 {dimension_numbers = #tpu.dot_dimension_numbers<[1], [0], [0], [1], [0, 0, 1, 1], [], []>} : vector<2x32xf32>, vector<32x10xf32>, vector<2x10xf32> -> vector<2x10xf32>
    %c0_16 = arith.constant 0 : index
    %c0_17 = arith.constant 0 : index
    %19 = vector.load %arg6[%c0_16, %c0_17] : memref<1x10xf32, #tpu.memory_space<vmem>>, vector<1x10xf32>
    %20 = vector.broadcast %19 : vector<1x10xf32> to vector<2x10xf32>
    %21 = arith.addf %18, %20 : vector<2x10xf32>
    %c0_18 = arith.constant 0 : index
    %c0_19 = arith.constant 0 : index
    %22 = vector.load %arg7[%c0_18, %c0_19] : memref<2x10xf32, #tpu.memory_space<vmem>>, vector<2x10xf32>
    tpu.vector_store %arg7[%c0_18, %c0_19], %21 {strides = array<i32>} : memref<2x10xf32, #tpu.memory_space<vmem>>, vector<2x10xf32>,
    return
  }
}

</mosaic_0001>

<llo_original>
// kernel: model_framer_forward.1
$region0: #{model_framer_forward.1}
  #allocation0 [shape = 'u32[]', space=smem, size = 0x4, offset = 0x4, fixed_abs, tag = 'smem constant byte address 0x4 - core index']
  #allocation1 [shape = 'u32[144,128]{1,0:T(1,128)}', space=vmem, size = 0x12000, scoped, tag = 'internal scratch']
  %s0 = inlined_call_operand.vmem [shape: f32[512,36], index: 0, kind: input, shape index: {}]
  %s1 = inlined_call_operand.vmem [shape: f32[36,32], index: 1, kind: input, shape index: {}]
  %s2 = inlined_call_operand.vmem [shape: f32[1,32], index: 2, kind: input, shape index: {}]
  %s3 = inlined_call_operand.vmem [shape: f32[32,32], index: 3, kind: input, shape index: {}]
  %s4 = inlined_call_operand.vmem [shape: f32[1,32], index: 4, kind: input, shape index: {}]
  %s5 = inlined_call_operand.vmem [shape: f32[32,10], index: 5, kind: input, shape index: {}]
  %s6 = inlined_call_operand.vmem [shape: f32[1,10], index: 6, kind: input, shape index: {}]
  %s7 = inlined_call_operand.hbm [shape: f32[2,10], index: 7, kind: output, shape index: {}]
  %s8 = sld [smem:[#allocation0]]
  $region38: #{model_framer_forward.1} parent=0
    _
  %s10 = ssub.s32 1, %s8
  %s11 = scalar_select 0, %s10, %s8
  $region1: #{model_framer_forward.1} parent=0
    #allocation2 [shape = 'u8[1024]{0}', space=vmem, size = 0x400, scoped, tag = 'output window, operand 0, single buffered']
    #allocation3 [shape = 's32[1]{0}', space=sflag, size = 0x4, scoped, tag = 'scoped memory for model_framer_forward.1']
    %12 = vsyncpa [#allocation3], 0
    // Predicated region
    $region2: #{model_framer_forward.1} parent=1 // pred_check
      _
    $region3: #{model_framer_forward.1} parent=1 // pred_check_branch
      %14 = sbr.rel (0) target = $region5
    $region4: #{model_framer_forward.1} parent=1 // pred_region
      _
    $region5: #{model_framer_forward.1} parent=1 // pred_fallthru
      _
    // Predicated region
    $region6: #{model_framer_forward.1} parent=1 // pred_check
      _
    $region7: #{model_framer_forward.1} parent=1 // pred_check_branch
      %16 = sbr.rel (0) target = $region9
    $region8: #{model_framer_forward.1} parent=1 // pred_region
      _
    $region9: #{model_framer_forward.1} parent=1 // pred_fallthru
      _
    // Predicated region
    $region10: #{model_framer_forward.1} parent=1 // pred_check
      _
    $region11: #{model_framer_forward.1} parent=1 // pred_check_branch
      %18 = sbr.rel (0) target = $region13
    $region12: #{model_framer_forward.1} parent=1 // pred_region
      _
    $region13: #{model_framer_forward.1} parent=1 // pred_fallthru
      _
    // Predicated region
    $region14: #{model_framer_forward.1} parent=1 // pred_check
      _
    $region15: #{model_framer_forward.1} parent=1 // pred_check_branch
      %20 = sbr.rel (0) target = $region17
    $region16: #{model_framer_forward.1} parent=1 // pred_region
      _
    $region17: #{model_framer_forward.1} parent=1 // pred_fallthru
      _
    // Predicated region
    $region18: #{model_framer_forward.1} parent=1 // pred_check
      _
    $region19: #{model_framer_forward.1} parent=1 // pred_check_branch
      %22 = sbr.rel (0) target = $region21
    $region20: #{model_framer_forward.1} parent=1 // pred_region
      _
    $region21: #{model_framer_forward.1} parent=1 // pred_fallthru
      _
    // Predicated region
    $region22: #{model_framer_forward.1} parent=1 // pred_check
      _
    $region23: #{model_framer_forward.1} parent=1 // pred_check_branch
      %24 = sbr.rel (0) target = $region25
    $region24: #{model_framer_forward.1} parent=1 // pred_region
      _
    $region25: #{model_framer_forward.1} parent=1 // pred_fallthru
      _
    // Predicated region
    $region26: #{model_framer_forward.1} parent=1 // pred_check
      _
    $region27: #{model_framer_forward.1} parent=1 // pred_check_branch
      %26 = sbr.rel (0) target = $region29
    $region28: #{model_framer_forward.1} parent=1 // pred_region
      _
    $region29: #{model_framer_forward.1} parent=1 // pred_fallthru
      _
    %v27 = vld [vmem:[%s0] sm:$0xff]
    %v28 = vld [vmem:[%s0 + $0x8] sm:$0xff]
    %v29 = vld [vmem:[%s0 + $0x10] sm:$0xff]
    %v30 = vld [vmem:[%s0 + $0x18] sm:$0xff]
    %v31 = vld [vmem:[%s0 + $0x20] sm:$0xff]
    %v32 = vld [vmem:[%s0 + $0x28] sm:$0xff]
    %v33 = vld [vmem:[%s0 + $0x30] sm:$0xff]
    %v34 = vld [vmem:[%s0 + $0x38] sm:$0xff]
    %v35 = vld [vmem:[%s0 + $0x40] sm:$0xff]
    %v36 = vld [vmem:[%s0 + $0x48] sm:$0xff]
    %v37 = vld [vmem:[%s0 + $0x50] sm:$0xff]
    %v38 = vld [vmem:[%s0 + $0x58] sm:$0xff]
    %v39 = vld [vmem:[%s0 + $0x60] sm:$0xff]
    %v40 = vld [vmem:[%s0 + $0x68] sm:$0xff]
    %v41 = vld [vmem:[%s0 + $0x70] sm:$0xff]
    %v42 = vld [vmem:[%s0 + $0x78] sm:$0xff]
    %v43 = vld [vmem:[%s0 + $0x80] sm:$0xff]
    %v44 = vld [vmem:[%s0 + $0x88] sm:$0xff]
    %v45 = vld [vmem:[%s0 + $0x90] sm:$0xff]
    %v46 = vld [vmem:[%s0 + $0x98] sm:$0xff]
    %v47 = vld [vmem:[%s0 + $0xa0] sm:$0xff]
    %v48 = vld [vmem:[%s0 + $0xa8] sm:$0xff]
    %v49 = vld [vmem:[%s0 + $0xb0] sm:$0xff]
    %v50 = vld [vmem:[%s0 + $0xb8] sm:$0xff]
    %v51 = vld [vmem:[%s0 + $0xc0] sm:$0xff]
    %v52 = vld [vmem:[%s0 + $0xc8] sm:$0xff]
    %v53 = vld [vmem:[%s0 + $0xd0] sm:$0xff]
    %v54 = vld [vmem:[%s0 + $0xd8] sm:$0xff]
    %v55 = vld [vmem:[%s0 + $0xe0] sm:$0xff]
    %v56 = vld [vmem:[%s0 + $0xe8] sm:$0xff]
    %v57 = vld [vmem:[%s0 + $0xf0] sm:$0xff]
    %v58 = vld [vmem:[%s0 + $0xf8] sm:$0xff]
    %v59 = vld [vmem:[%s0 + $0x100] sm:$0xff]
    %v60 = vld [vmem:[%s0 + $0x108] sm:$0xff]
    %v61 = vld [vmem:[%s0 + $0x110] sm:$0xff]
    %v62 = vld [vmem:[%s0 + $0x118] sm:$0xff]
    %v63 = vld [vmem:[%s0 + $0x120] sm:$0xff]
    %v64 = vld [vmem:[%s0 + $0x128] sm:$0xff]
    %v65 = vld [vmem:[%s0 + $0x130] sm:$0xff]
    %v66 = vld [vmem:[%s0 + $0x138] sm:$0xff]
    %v67 = vld [vmem:[%s0 + $0x140] sm:$0xff]
    %v68 = vld [vmem:[%s0 + $0x148] sm:$0xff]
    %v69 = vld [vmem:[%s0 + $0x150] sm:$0xff]
    %v70 = vld [vmem:[%s0 + $0x158] sm:$0xff]
    %v71 = vld [vmem:[%s0 + $0x160] sm:$0xff]
    %v72 = vld [vmem:[%s0 + $0x168] sm:$0xff]
    %v73 = vld [vmem:[%s0 + $0x170] sm:$0xff]
    %v74 = vld [vmem:[%s0 + $0x178] sm:$0xff]
    %v75 = vld [vmem:[%s0 + $0x180] sm:$0xff]
    %v76 = vld [vmem:[%s0 + $0x188] sm:$0xff]
    %v77 = vld [vmem:[%s0 + $0x190] sm:$0xff]
    %v78 = vld [vmem:[%s0 + $0x198] sm:$0xff]
    %v79 = vld [vmem:[%s0 + $0x1a0] sm:$0xff]
    %v80 = vld [vmem:[%s0 + $0x1a8] sm:$0xff]
    %v81 = vld [vmem:[%s0 + $0x1b0] sm:$0xff]
    %v82 = vld [vmem:[%s0 + $0x1b8] sm:$0xff]
    %v83 = vld [vmem:[%s0 + $0x1c0] sm:$0xff]
    %v84 = vld [vmem:[%s0 + $0x1c8] sm:$0xff]
    %v85 = vld [vmem:[%s0 + $0x1d0] sm:$0xff]
    %v86 = vld [vmem:[%s0 + $0x1d8] sm:$0xff]
    %v87 = vld [vmem:[%s0 + $0x1e0] sm:$0xff]
    %v88 = vld [vmem:[%s0 + $0x1e8] sm:$0xff]
    %v89 = vld [vmem:[%s0 + $0x1f0] sm:$0xff]
    %v90 = vld [vmem:[%s0 + $0x1f8] sm:$0xff]
    %v91 = vld [vmem:[%s1] sm:$0xff]
    %v92 = vld [vmem:[%s1 + $0x8] sm:$0xff]
    %v93 = vld [vmem:[%s1 + $0x10] sm:$0xff]
    %v94 = vld [vmem:[%s1 + $0x18] sm:$0xff]
    %v95 = vld [vmem:[%s1 + $0x20] sm:$0xf]
    %v96 = vld [vmem:[%s2] sm:$0x1]
    %v98 = vlaneseq
    %v99 = vshrl.u32 %v98, 7
    %v100 = vsub.s32 0, %v99
    %v101 = vrot.slane %v96, %v100
    %vm103 = vcmask 293888
    %v105 = vsel %vm103, %v27, 0
    %v108 = vsel %vm103, %v28, 0
    %v111 = vsel %vm103, %v29, 0
    %v114 = vsel %vm103, %v30, 0
    %v117 = vsel %vm103, %v31, 0
    %v120 = vsel %vm103, %v32, 0
    %v123 = vsel %vm103, %v33, 0
    %v126 = vsel %vm103, %v34, 0
    %v129 = vsel %vm103, %v35, 0
    %v132 = vsel %vm103, %v36, 0
    %v135 = vsel %vm103, %v37, 0
    %v138 = vsel %vm103, %v38, 0
    %v141 = vsel %vm103, %v39, 0
    %v144 = vsel %vm103, %v40, 0
    %v147 = vsel %vm103, %v41, 0
    %v150 = vsel %vm103, %v42, 0
    %v153 = vsel %vm103, %v43, 0
    %v156 = vsel %vm103, %v44, 0
    %v159 = vsel %vm103, %v45, 0
    %v162 = vsel %vm103, %v46, 0
    %v165 = vsel %vm103, %v47, 0
    %v168 = vsel %vm103, %v48, 0
    %v171 = vsel %vm103, %v49, 0
    %v174 = vsel %vm103, %v50, 0
    %v177 = vsel %vm103, %v51, 0
    %v180 = vsel %vm103, %v52, 0
    %v183 = vsel %vm103, %v53, 0
    %v186 = vsel %vm103, %v54, 0
    %v189 = vsel %vm103, %v55, 0
    %v192 = vsel %vm103, %v56, 0
    %v195 = vsel %vm103, %v57, 0
    %v198 = vsel %vm103, %v58, 0
    %v201 = vsel %vm103, %v59, 0
    %v204 = vsel %vm103, %v60, 0
    %v207 = vsel %vm103, %v61, 0
    %v210 = vsel %vm103, %v62, 0
    %v213 = vsel %vm103, %v63, 0
    %v216 = vsel %vm103, %v64, 0
    %v219 = vsel %vm103, %v65, 0
    %v222 = vsel %vm103, %v66, 0
    %v225 = vsel %vm103, %v67, 0
    %v228 = vsel %vm103, %v68, 0
    %v231 = vsel %vm103, %v69, 0
    %v234 = vsel %vm103, %v70, 0
    %v237 = vsel %vm103, %v71, 0
    %v240 = vsel %vm103, %v72, 0
    %v243 = vsel %vm103, %v73, 0
    %v246 = vsel %vm103, %v74, 0
    %v249 = vsel %vm103, %v75, 0
    %v252 = vsel %vm103, %v76, 0
    %v255 = vsel %vm103, %v77, 0
    %v258 = vsel %vm103, %v78, 0
    %v261 = vsel %vm103, %v79, 0
    %v264 = vsel %vm103, %v80, 0
    %v267 = vsel %vm103, %v81, 0
    %v270 = vsel %vm103, %v82, 0
    %v273 = vsel %vm103, %v83, 0
    %v276 = vsel %vm103, %v84, 0
    %v279 = vsel %vm103, %v85, 0
    %v282 = vsel %vm103, %v86, 0
    %v285 = vsel %vm103, %v87, 0
    %v288 = vsel %vm103, %v88, 0
    %v291 = vsel %vm103, %v89, 0
    %v294 = vsel %vm103, %v90, 0
    %vm296 = vcmask 1043456
    %v298 = vsel %vm296, %v95, 0
    %300 = vmatprep.subr.mxu0 0.0
    %301 = vmatpush1.msra.mxu0 %v91
    %302 = vmatprep.subr.mxu0 0.0
    %303 = vmatpush1.msra.mxu0 %v92
    %304 = vmatprep.subr.mxu0 0.0
    %305 = vmatpush1.msra.mxu0 %v93
    %306 = vmatprep.subr.mxu0 0.0
    %307 = vmatpush1.msra.mxu0 %v94
    %308 = vmatprep.subr.mxu0 0.0
    %309 = vmatpush1.msra.mxu0 %v298
    %310 = vmatprep.subr.mxu0 0.0
    %311 = vmatpush1.msra.mxu0 0.0
    %312 = vmatprep.subr.mxu0 0.0
    %313 = vmatpush1.msra.mxu0 0.0
    %314 = vmatprep.subr.mxu0 0.0
    %315 = vmatpush1.msra.mxu0 0.0
    %316 = vmatprep.subr.mxu0 0.0
    %317 = vmatpush1.msra.mxu0 0.0
    %318 = vmatprep.subr.mxu0 0.0
    %319 = vmatpush1.msra.mxu0 0.0
    %320 = vmatprep.subr.mxu0 0.0
    %321 = vmatpush1.msra.mxu0 0.0
    %322 = vmatprep.subr.mxu0 0.0
    %323 = vmatpush1.msra.mxu0 0.0
    %324 = vmatprep.subr.mxu0 0.0
    %325 = vmatpush1.msra.mxu0 0.0
    %326 = vmatprep.subr.mxu0 0.0
    %327 = vmatpush1.msra.mxu0 0.0
    %328 = vmatprep.subr.mxu0 0.0
    %329 = vmatpush1.msra.mxu0 0.0
    %330 = vmatprep.subr.mxu0 0.0
    %331 = vmatpush1.msra.mxu0 0.0
    %332 = vmatprep.subr.mxu0 0.0
    %333 = vmatpush1.msra.mxu0 0.0
    %334 = vmatprep.subr.mxu0 0.0
    %335 = vmatpush1.msra.mxu0 0.0
    %336 = vmatprep.subr.mxu0 0.0
    %337 = vmatpush1.msra.mxu0 0.0
    %338 = vmatprep.subr.mxu0 0.0
    %339 = vmatpush1.msra.mxu0 0.0
    %340 = vmatprep.subr.mxu0 0.0
    %341 = vmatpush1.msra.mxu0 0.0
    %342 = vmatprep.subr.mxu0 0.0
    %343 = vmatpush1.msra.mxu0 0.0
    %344 = vmatprep.subr.mxu0 0.0
    %345 = vmatpush1.msra.mxu0 0.0
    %346 = vmatprep.subr.mxu0 0.0
    %347 = vmatpush1.msra.mxu0 0.0
    %348 = vmatprep.subr.mxu0 0.0
    %349 = vmatpush1.msra.mxu0 0.0
    %350 = vmatprep.subr.mxu0 0.0
    %351 = vmatpush1.msra.mxu0 0.0
    %352 = vmatprep.subr.mxu0 0.0
    %353 = vmatpush1.msra.mxu0 0.0
    %354 = vmatprep.subr.mxu0 0.0
    %355 = vmatpush1.msra.mxu0 0.0
    %356 = vmatprep.subr.mxu0 0.0
    %357 = vmatpush1.msra.mxu0 0.0
    %358 = vmatprep.subr.mxu0 0.0
    %359 = vmatpush1.msra.mxu0 0.0
    %360 = vmatprep.subr.mxu0 0.0
    %361 = vmatpush1.msra.mxu0 0.0
    %362 = vmatprep.subr.mxu0 0.0
    %363 = vmatpush1.msra.mxu0 0.0
    %364 = vmatprep.mubr.f32.mxu0 0.0
    %365 = vmatmul.mubr.f32.gmra.mrb[0].mxu0 %v105
    %v366 = vpop.f32.mrb[0].mxu0
    %v367 = vadd.f32 %v101, %v366
    %v368 = vpop.f32.mrb[0].mxu0
    %369 = vmatprep.mubr.f32.mxu0 0.0
    %370 = vmatmul.mubr.f32.gmra.mrb[0].mxu0 %v108
    %v371 = vpop.f32.mrb[0].mxu0
    %v372 = vadd.f32 %v101, %v371
    %v373 = vpop.f32.mrb[0].mxu0
    %374 = vmatprep.mubr.f32.mxu0 0.0
    %375 = vmatmul.mubr.f32.gmra.mrb[0].mxu0 %v111
    %v376 = vpop.f32.mrb[0].mxu0
    %v377 = vadd.f32 %v101, %v376
    %v378 = vpop.f32.mrb[0].mxu0
    %379 = vmatprep.mubr.f32.mxu0 0.0
    %380 = vmatmul.mubr.f32.gmra.mrb[0].mxu0 %v114
    %v381 = vpop.f32.mrb[0].mxu0
    %v382 = vadd.f32 %v101, %v381
    %v383 = vpop.f32.mrb[0].mxu0
    %384 = vmatprep.mubr.f32.mxu0 0.0
    %385 = vmatmul.mubr.f32.gmra.mrb[0].mxu0 %v117
    %v386 = vpop.f32.mrb[0].mxu0
    %v387 = vadd.f32 %v101, %v386
    %v388 = vpop.f32.mrb[0].mxu0
    %389 = vmatprep.mubr.f32.mxu0 0.0
    %390 = vmatmul.mubr.f32.gmra.mrb[0].mxu0 %v120
    %v391 = vpop.f32.mrb[0].mxu0
    %v392 = vadd.f32 %v101, %v391
    %v393 = vpop.f32.mrb[0].mxu0
    %394 = vmatprep.mubr.f32.mxu0 0.0
    %395 = vmatmul.mubr.f32.gmra.mrb[0].mxu0 %v123
    %v396 = vpop.f32.mrb[0].mxu0
    %v397 = vadd.f32 %v101, %v396
    %v398 = vpop.f32.mrb[0].mxu0
    %399 = vmatprep.mubr.f32.mxu0 0.0
    %400 = vmatmul.mubr.f32.gmra.mrb[0].mxu0 %v126
    %v401 = vpop.f32.mrb[0].mxu0
    %v402 = vadd.f32 %v101, %v401
    %v403 = vpop.f32.mrb[0].mxu0
    %404 = vmatprep.mubr.f32.mxu0 0.0
    %405 = vmatmul.mubr.f32.gmra.mrb[0].mxu0 %v129
    %v406 = vpop.f32.mrb[0].mxu0
    %v407 = vadd.f32 %v101, %v406
    %v408 = vpop.f32.mrb[0].mxu0
    %409 = vmatprep.mubr.f32.mxu0 0.0
    %410 = vmatmul.mubr.f32.gmra.mrb[0].mxu0 %v132
    %v411 = vpop.f32.mrb[0].mxu0
    %v412 = vadd.f32 %v101, %v411
    %v413 = vpop.f32.mrb[0].mxu0
    %414 = vmatprep.mubr.f32.mxu0 0.0
    %415 = vmatmul.mubr.f32.gmra.mrb[0].mxu0 %v135
    %v416 = vpop.f32.mrb[0].mxu0
    %v417 = vadd.f32 %v101, %v416
    %v418 = vpop.f32.mrb[0].mxu0
    %419 = vmatprep.mubr.f32.mxu0 0.0
    %420 = vmatmul.mubr.f32.gmra.mrb[0].mxu0 %v138
    %v421 = vpop.f32.mrb[0].mxu0
    %v422 = vadd.f32 %v101, %v421
    %v423 = vpop.f32.mrb[0].mxu0
    %424 = vmatprep.mubr.f32.mxu0 0.0
    %425 = vmatmul.mubr.f32.gmra.mrb[0].mxu0 %v141
    %v426 = vpop.f32.mrb[0].mxu0
    %v427 = vadd.f32 %v101, %v426
    %v428 = vpop.f32.mrb[0].mxu0
    %429 = vmatprep.mubr.f32.mxu0 0.0
    %430 = vmatmul.mubr.f32.gmra.mrb[0].mxu0 %v144
    %v431 = vpop.f32.mrb[0].mxu0
    %v432 = vadd.f32 %v101, %v431
    %v433 = vpop.f32.mrb[0].mxu0
    %434 = vmatprep.mubr.f32.mxu0 0.0
    %435 = vmatmul.mubr.f32.gmra.mrb[0].mxu0 %v147
    %v436 = vpop.f32.mrb[0].mxu0
    %v437 = vadd.f32 %v101, %v436
    %v438 = vpop.f32.mrb[0].mxu0
    %439 = vmatprep.mubr.f32.mxu0 0.0
    %440 = vmatmul.mubr.f32.gmra.mrb[0].mxu0 %v150
    %v441 = vpop.f32.mrb[0].mxu0
    %v442 = vadd.f32 %v101, %v441
    %v443 = vpop.f32.mrb[0].mxu0
    %444 = vmatprep.mubr.f32.mxu0 0.0
    %445 = vmatmul.mubr.f32.gmra.mrb[0].mxu0 %v153
    %v446 = vpop.f32.mrb[0].mxu0
    %v447 = vadd.f32 %v101, %v446
    %v448 = vpop.f32.mrb[0].mxu0
    %449 = vmatprep.mubr.f32.mxu0 0.0
    %450 = vmatmul.mubr.f32.gmra.mrb[0].mxu0 %v156
    %v451 = vpop.f32.mrb[0].mxu0
    %v452 = vadd.f32 %v101, %v451
    %v453 = vpop.f32.mrb[0].mxu0
    %454 = vmatprep.mubr.f32.mxu0 0.0
    %455 = vmatmul.mubr.f32.gmra.mrb[0].mxu0 %v159
    %v456 = vpop.f32.mrb[0].mxu0
    %v457 = vadd.f32 %v101, %v456
    %v458 = vpop.f32.mrb[0].mxu0
    %459 = vmatprep.mubr.f32.mxu0 0.0
    %460 = vmatmul.mubr.f32.gmra.mrb[0].mxu0 %v162
    %v461 = vpop.f32.mrb[0].mxu0
    %v462 = vadd.f32 %v101, %v461
    %v463 = vpop.f32.mrb[0].mxu0
    %464 = vmatprep.mubr.f32.mxu0 0.0
    %465 = vmatmul.mubr.f32.gmra.mrb[0].mxu0 %v165
    %v466 = vpop.f32.mrb[0].mxu0
    %v467 = vadd.f32 %v101, %v466
    %v468 = vpop.f32.mrb[0].mxu0
    %469 = vmatprep.mubr.f32.mxu0 0.0
    %470 = vmatmul.mubr.f32.gmra.mrb[0].mxu0 %v168
    %v471 = vpop.f32.mrb[0].mxu0
    %v472 = vadd.f32 %v101, %v471
    %v473 = vpop.f32.mrb[0].mxu0
    %474 = vmatprep.mubr.f32.mxu0 0.0
    %475 = vmatmul.mubr.f32.gmra.mrb[0].mxu0 %v171
    %v476 = vpop.f32.mrb[0].mxu0
    %v477 = vadd.f32 %v101, %v476
    %v478 = vpop.f32.mrb[0].mxu0
    %479 = vmatprep.mubr.f32.mxu0 0.0
    %480 = vmatmul.mubr.f32.gmra.mrb[0].mxu0 %v174
    %v481 = vpop.f32.mrb[0].mxu0
    %v482 = vadd.f32 %v101, %v481
    %v483 = vpop.f32.mrb[0].mxu0
    %484 = vmatprep.mubr.f32.mxu0 0.0
    %485 = vmatmul.mubr.f32.gmra.mrb[0].mxu0 %v177
    %v486 = vpop.f32.mrb[0].mxu0
    %v487 = vadd.f32 %v101, %v486
    %v488 = vpop.f32.mrb[0].mxu0
    %489 = vmatprep.mubr.f32.mxu0 0.0
    %490 = vmatmul.mubr.f32.gmra.mrb[0].mxu0 %v180
    %v491 = vpop.f32.mrb[0].mxu0
    %v492 = vadd.f32 %v101, %v491
    %v493 = vpop.f32.mrb[0].mxu0
    %494 = vmatprep.mubr.f32.mxu0 0.0
    %495 = vmatmul.mubr.f32.gmra.mrb[0].mxu0 %v183
    %v496 = vpop.f32.mrb[0].mxu0
    %v497 = vadd.f32 %v101, %v496
    %v498 = vpop.f32.mrb[0].mxu0
    %499 = vmatprep.mubr.f32.mxu0 0.0
    %500 = vmatmul.mubr.f32.gmra.mrb[0].mxu0 %v186
    %v501 = vpop.f32.mrb[0].mxu0
    %v502 = vadd.f32 %v101, %v501
    %v503 = vpop.f32.mrb[0].mxu0
    %504 = vmatprep.mubr.f32.mxu0 0.0
    %505 = vmatmul.mubr.f32.gmra.mrb[0].mxu0 %v189
    %v506 = vpop.f32.mrb[0].mxu0
    %v507 = vadd.f32 %v101, %v506
    %v508 = vpop.f32.mrb[0].mxu0
    %509 = vmatprep.mubr.f32.mxu0 0.0
    %510 = vmatmul.mubr.f32.gmra.mrb[0].mxu0 %v192
    %v511 = vpop.f32.mrb[0].mxu0
    %v512 = vadd.f32 %v101, %v511
    %v513 = vpop.f32.mrb[0].mxu0
    %514 = vmatprep.mubr.f32.mxu0 0.0
    %515 = vmatmul.mubr.f32.gmra.mrb[0].mxu0 %v195
    %v516 = vpop.f32.mrb[0].mxu0
    %v517 = vadd.f32 %v101, %v516
    %v518 = vpop.f32.mrb[0].mxu0
    %519 = vmatprep.mubr.f32.mxu0 0.0
    %520 = vmatmul.mubr.f32.gmra.mrb[0].mxu0 %v198
    %v521 = vpop.f32.mrb[0].mxu0
    %v522 = vadd.f32 %v101, %v521
    %v523 = vpop.f32.mrb[0].mxu0
    %524 = vmatprep.mubr.f32.mxu0 0.0
    %525 = vmatmul.mubr.f32.gmra.mrb[0].mxu0 %v201
    %v526 = vpop.f32.mrb[0].mxu0
    %v527 = vadd.f32 %v101, %v526
    %v528 = vpop.f32.mrb[0].mxu0
    %529 = vmatprep.mubr.f32.mxu0 0.0
    %530 = vmatmul.mubr.f32.gmra.mrb[0].mxu0 %v204
    %v531 = vpop.f32.mrb[0].mxu0
    %v532 = vadd.f32 %v101, %v531
    %v533 = vpop.f32.mrb[0].mxu0
    %534 = vmatprep.mubr.f32.mxu0 0.0
    %535 = vmatmul.mubr.f32.gmra.mrb[0].mxu0 %v207
    %v536 = vpop.f32.mrb[0].mxu0
    %v537 = vadd.f32 %v101, %v536
    %v538 = vpop.f32.mrb[0].mxu0
    %539 = vmatprep.mubr.f32.mxu0 0.0
    %540 = vmatmul.mubr.f32.gmra.mrb[0].mxu0 %v210
    %v541 = vpop.f32.mrb[0].mxu0
    %v542 = vadd.f32 %v101, %v541
    %v543 = vpop.f32.mrb[0].mxu0
    %544 = vmatprep.mubr.f32.mxu0 0.0
    %545 = vmatmul.mubr.f32.gmra.mrb[0].mxu0 %v213
    %v546 = vpop.f32.mrb[0].mxu0
    %v547 = vadd.f32 %v101, %v546
    %v548 = vpop.f32.mrb[0].mxu0
    %549 = vmatprep.mubr.f32.mxu0 0.0
    %550 = vmatmul.mubr.f32.gmra.mrb[0].mxu0 %v216
    %v551 = vpop.f32.mrb[0].mxu0
    %v552 = vadd.f32 %v101, %v551
    %v553 = vpop.f32.mrb[0].mxu0
    %554 = vmatprep.mubr.f32.mxu0 0.0
    %555 = vmatmul.mubr.f32.gmra.mrb[0].mxu0 %v219
    %v556 = vpop.f32.mrb[0].mxu0
    %v557 = vadd.f32 %v101, %v556
    %v558 = vpop.f32.mrb[0].mxu0
    %559 = vmatprep.mubr.f32.mxu0 0.0
    %560 = vmatmul.mubr.f32.gmra.mrb[0].mxu0 %v222
    %v561 = vpop.f32.mrb[0].mxu0
    %v562 = vadd.f32 %v101, %v561
    %v563 = vpop.f32.mrb[0].mxu0
    %564 = vmatprep.mubr.f32.mxu0 0.0
    %565 = vmatmul.mubr.f32.gmra.mrb[0].mxu0 %v225
    %v566 = vpop.f32.mrb[0].mxu0
    %v567 = vadd.f32 %v101, %v566
    %v568 = vpop.f32.mrb[0].mxu0
    %569 = vmatprep.mubr.f32.mxu0 0.0
    %570 = vmatmul.mubr.f32.gmra.mrb[0].mxu0 %v228
    %v571 = vpop.f32.mrb[0].mxu0
    %v572 = vadd.f32 %v101, %v571
    %v573 = vpop.f32.mrb[0].mxu0
    %574 = vmatprep.mubr.f32.mxu0 0.0
    %575 = vmatmul.mubr.f32.gmra.mrb[0].mxu0 %v231
    %v576 = vpop.f32.mrb[0].mxu0
    %v577 = vadd.f32 %v101, %v576
    %v578 = vpop.f32.mrb[0].mxu0
    %579 = vmatprep.mubr.f32.mxu0 0.0
    %580 = vmatmul.mubr.f32.gmra.mrb[0].mxu0 %v234
    %v581 = vpop.f32.mrb[0].mxu0
    %v582 = vadd.f32 %v101, %v581
    %v583 = vpop.f32.mrb[0].mxu0
    %584 = vmatprep.mubr.f32.mxu0 0.0
    %585 = vmatmul.mubr.f32.gmra.mrb[0].mxu0 %v237
    %v586 = vpop.f32.mrb[0].mxu0
    %v587 = vadd.f32 %v101, %v586
    %v588 = vpop.f32.mrb[0].mxu0
    %589 = vmatprep.mubr.f32.mxu0 0.0
    %590 = vmatmul.mubr.f32.gmra.mrb[0].mxu0 %v240
    %v591 = vpop.f32.mrb[0].mxu0
    %v592 = vadd.f32 %v101, %v591
    %v593 = vpop.f32.mrb[0].mxu0
    %594 = vmatprep.mubr.f32.mxu0 0.0
    %595 = vmatmul.mubr.f32.gmra.mrb[0].mxu0 %v243
    %v596 = vpop.f32.mrb[0].mxu0
    %v597 = vadd.f32 %v101, %v596
    %v598 = vpop.f32.mrb[0].mxu0
    %599 = vmatprep.mubr.f32.mxu0 0.0
    %600 = vmatmul.mubr.f32.gmra.mrb[0].mxu0 %v246
    %v601 = vpop.f32.mrb[0].mxu0
    %v602 = vadd.f32 %v101, %v601
    %v603 = vpop.f32.mrb[0].mxu0
    %604 = vmatprep.mubr.f32.mxu0 0.0
    %605 = vmatmul.mubr.f32.gmra.mrb[0].mxu0 %v249
    %v606 = vpop.f32.mrb[0].mxu0
    %v607 = vadd.f32 %v101, %v606
    %v608 = vpop.f32.mrb[0].mxu0
    %609 = vmatprep.mubr.f32.mxu0 0.0
    %610 = vmatmul.mubr.f32.gmra.mrb[0].mxu0 %v252
    %v611 = vpop.f32.mrb[0].mxu0
    %v612 = vadd.f32 %v101, %v611
    %v613 = vpop.f32.mrb[0].mxu0
    %614 = vmatprep.mubr.f32.mxu0 0.0
    %615 = vmatmul.mubr.f32.gmra.mrb[0].mxu0 %v255
    %v616 = vpop.f32.mrb[0].mxu0
    %v617 = vadd.f32 %v101, %v616
    %v618 = vpop.f32.mrb[0].mxu0
    %619 = vmatprep.mubr.f32.mxu0 0.0
    %620 = vmatmul.mubr.f32.gmra.mrb[0].mxu0 %v258
    %v621 = vpop.f32.mrb[0].mxu0
    %v622 = vadd.f32 %v101, %v621
    %v623 = vpop.f32.mrb[0].mxu0
    %624 = vmatprep.mubr.f32.mxu0 0.0
    %625 = vmatmul.mubr.f32.gmra.mrb[0].mxu0 %v261
    %v626 = vpop.f32.mrb[0].mxu0
    %v627 = vadd.f32 %v101, %v626
    %v628 = vpop.f32.mrb[0].mxu0
    %629 = vmatprep.mubr.f32.mxu0 0.0
    %630 = vmatmul.mubr.f32.gmra.mrb[0].mxu0 %v264
    %v631 = vpop.f32.mrb[0].mxu0
    %v632 = vadd.f32 %v101, %v631
    %v633 = vpop.f32.mrb[0].mxu0
    %634 = vmatprep.mubr.f32.mxu0 0.0
    %635 = vmatmul.mubr.f32.gmra.mrb[0].mxu0 %v267
    %v636 = vpop.f32.mrb[0].mxu0
    %v637 = vadd.f32 %v101, %v636
    %v638 = vpop.f32.mrb[0].mxu0
    %639 = vmatprep.mubr.f32.mxu0 0.0
    %640 = vmatmul.mubr.f32.gmra.mrb[0].mxu0 %v270
    %v641 = vpop.f32.mrb[0].mxu0
    %v642 = vadd.f32 %v101, %v641
    %v643 = vpop.f32.mrb[0].mxu0
    %644 = vmatprep.mubr.f32.mxu0 0.0
    %645 = vmatmul.mubr.f32.gmra.mrb[0].mxu0 %v273
    %v646 = vpop.f32.mrb[0].mxu0
    %v647 = vadd.f32 %v101, %v646
    %v648 = vpop.f32.mrb[0].mxu0
    %649 = vmatprep.mubr.f32.mxu0 0.0
    %650 = vmatmul.mubr.f32.gmra.mrb[0].mxu0 %v276
    %v651 = vpop.f32.mrb[0].mxu0
    %v652 = vadd.f32 %v101, %v651
    %v653 = vpop.f32.mrb[0].mxu0
    %654 = vmatprep.mubr.f32.mxu0 0.0
    %655 = vmatmul.mubr.f32.gmra.mrb[0].mxu0 %v279
    %v656 = vpop.f32.mrb[0].mxu0
    %v657 = vadd.f32 %v101, %v656
    %v658 = vpop.f32.mrb[0].mxu0
    %659 = vmatprep.mubr.f32.mxu0 0.0
    %660 = vmatmul.mubr.f32.gmra.mrb[0].mxu0 %v282
    %v661 = vpop.f32.mrb[0].mxu0
    %v662 = vadd.f32 %v101, %v661
    %v663 = vpop.f32.mrb[0].mxu0
    %664 = vmatprep.mubr.f32.mxu0 0.0
    %665 = vmatmul.mubr.f32.gmra.mrb[0].mxu0 %v285
    %v666 = vpop.f32.mrb[0].mxu0
    %v667 = vadd.f32 %v101, %v666
    %v668 = vpop.f32.mrb[0].mxu0
    %669 = vmatprep.mubr.f32.mxu0 0.0
    %670 = vmatmul.mubr.f32.gmra.mrb[0].mxu0 %v288
    %v671 = vpop.f32.mrb[0].mxu0
    %v672 = vadd.f32 %v101, %v671
    %v673 = vpop.f32.mrb[0].mxu0
    %674 = vmatprep.mubr.f32.mxu0 0.0
    %675 = vmatmul.mubr.f32.gmra.mrb[0].mxu0 %v291
    %v676 = vpop.f32.mrb[0].mxu0
    %v677 = vadd.f32 %v101, %v676
    %v678 = vpop.f32.mrb[0].mxu0
    %679 = vmatprep.mubr.f32.mxu0 0.0
    %680 = vmatmul.mubr.f32.gmra.mrb[0].mxu0 %v294
    %v681 = vpop.f32.mrb[0].mxu0
    %v682 = vadd.f32 %v101, %v681
    %v683 = vpop.f32.mrb[0].mxu0
    %684 = vdwg.mxu0
    %v685 = vmax.f32 %v367, 0.0
    %v686 = vmax.f32 %v372, 0.0
    %v687 = vmax.f32 %v377, 0.0
    %v688 = vmax.f32 %v382, 0.0
    %v689 = vmax.f32 %v387, 0.0
    %v690 = vmax.f32 %v392, 0.0
    %v691 = vmax.f32 %v397, 0.0
    %v692 = vmax.f32 %v402, 0.0
    %v693 = vmax.f32 %v407, 0.0
    %v694 = vmax.f32 %v412, 0.0
    %v695 = vmax.f32 %v417, 0.0
    %v696 = vmax.f32 %v422, 0.0
    %v697 = vmax.f32 %v427, 0.0
    %v698 = vmax.f32 %v432, 0.0
    %v699 = vmax.f32 %v437, 0.0
    %v700 = vmax.f32 %v442, 0.0
    %v701 = vmax.f32 %v447, 0.0
    %v702 = vmax.f32 %v452, 0.0
    %v703 = vmax.f32 %v457, 0.0
    %v704 = vmax.f32 %v462, 0.0
    %v705 = vmax.f32 %v467, 0.0
    %v706 = vmax.f32 %v472, 0.0
    %v707 = vmax.f32 %v477, 0.0
    %v708 = vmax.f32 %v482, 0.0
    %v709 = vmax.f32 %v487, 0.0
    %v710 = vmax.f32 %v492, 0.0
    %v711 = vmax.f32 %v497, 0.0
    %v712 = vmax.f32 %v502, 0.0
    %v713 = vmax.f32 %v507, 0.0
    %v714 = vmax.f32 %v512, 0.0
    %v715 = vmax.f32 %v517, 0.0
    %v716 = vmax.f32 %v522, 0.0
    %v717 = vmax.f32 %v527, 0.0
    %v718 = vmax.f32 %v532, 0.0
    %v719 = vmax.f32 %v537, 0.0
    %v720 = vmax.f32 %v542, 0.0
    %v721 = vmax.f32 %v547, 0.0
    %v722 = vmax.f32 %v552, 0.0
    %v723 = vmax.f32 %v557, 0.0
    %v724 = vmax.f32 %v562, 0.0
    %v725 = vmax.f32 %v567, 0.0
    %v726 = vmax.f32 %v572, 0.0
    %v727 = vmax.f32 %v577, 0.0
    %v728 = vmax.f32 %v582, 0.0
    %v729 = vmax.f32 %v587, 0.0
    %v730 = vmax.f32 %v592, 0.0
    %v731 = vmax.f32 %v597, 0.0
    %v732 = vmax.f32 %v602, 0.0
    %v733 = vmax.f32 %v607, 0.0
    %v734 = vmax.f32 %v612, 0.0
    %v735 = vmax.f32 %v617, 0.0
    %v736 = vmax.f32 %v622, 0.0
    %v737 = vmax.f32 %v627, 0.0
    %v738 = vmax.f32 %v632, 0.0
    %v739 = vmax.f32 %v637, 0.0
    %v740 = vmax.f32 %v642, 0.0
    %v741 = vmax.f32 %v647, 0.0
    %v742 = vmax.f32 %v652, 0.0
    %v743 = vmax.f32 %v657, 0.0
    %v744 = vmax.f32 %v662, 0.0
    %v745 = vmax.f32 %v667, 0.0
    %v746 = vmax.f32 %v672, 0.0
    %v747 = vmax.f32 %v677, 0.0
    %v748 = vmax.f32 %v682, 0.0
    %v749 = vld [vmem:[%s3] sm:$0xff]
    %v750 = vld [vmem:[%s3 + $0x8] sm:$0xff]
    %v751 = vld [vmem:[%s3 + $0x10] sm:$0xff]
    %v752 = vld [vmem:[%s3 + $0x18] sm:$0xff]
    %v753 = vld [vmem:[%s4] sm:$0x1]
    %v755 = vlaneseq
    %v756 = vshrl.u32 %v755, 7
    %v757 = vsub.s32 0, %v756
    %v758 = vrot.slane %v753, %v757
    %vm760 = vcmask 261120
    %v762 = vsel %vm760, %v685, 0
    %v765 = vsel %vm760, %v686, 0
    %v768 = vsel %vm760, %v687, 0
    %v771 = vsel %vm760, %v688, 0
    %v774 = vsel %vm760, %v689, 0
    %v777 = vsel %vm760, %v690, 0
    %v780 = vsel %vm760, %v691, 0
    %v783 = vsel %vm760, %v692, 0
    %v786 = vsel %vm760, %v693, 0
    %v789 = vsel %vm760, %v694, 0
    %v792 = vsel %vm760, %v695, 0
    %v795 = vsel %vm760, %v696, 0
    %v798 = vsel %vm760, %v697, 0
    %v801 = vsel %vm760, %v698, 0
    %v804 = vsel %vm760, %v699, 0
    %v807 = vsel %vm760, %v700, 0
    %v810 = vsel %vm760, %v701, 0
    %v813 = vsel %vm760, %v702, 0
    %v816 = vsel %vm760, %v703, 0
    %v819 = vsel %vm760, %v704, 0
    %v822 = vsel %vm760, %v705, 0
    %v825 = vsel %vm760, %v706, 0
    %v828 = vsel %vm760, %v707, 0
    %v831 = vsel %vm760, %v708, 0
    %v834 = vsel %vm760, %v709, 0
    %v837 = vsel %vm760, %v710, 0
    %v840 = vsel %vm760, %v711, 0
    %v843 = vsel %vm760, %v712, 0
    %v846 = vsel %vm760, %v713, 0
    %v849 = vsel %vm760, %v714, 0
    %v852 = vsel %vm760, %v715, 0
    %v855 = vsel %vm760, %v716, 0
    %v858 = vsel %vm760, %v717, 0
    %v861 = vsel %vm760, %v718, 0
    %v864 = vsel %vm760, %v719, 0
    %v867 = vsel %vm760, %v720, 0
    %v870 = vsel %vm760, %v721, 0
    %v873 = vsel %vm760, %v722, 0
    %v876 = vsel %vm760, %v723, 0
    %v879 = vsel %vm760, %v724, 0
    %v882 = vsel %vm760, %v725, 0
    %v885 = vsel %vm760, %v726, 0
    %v888 = vsel %vm760, %v727, 0
    %v891 = vsel %vm760, %v728, 0
    %v894 = vsel %vm760, %v729, 0
    %v897 = vsel %vm760, %v730, 0
    %v900 = vsel %vm760, %v731, 0
    %v903 = vsel %vm760, %v732, 0
    %v906 = vsel %vm760, %v733, 0
    %v909 = vsel %vm760, %v734, 0
    %v912 = vsel %vm760, %v735, 0
    %v915 = vsel %vm760, %v736, 0
    %v918 = vsel %vm760, %v737, 0
    %v921 = vsel %vm760, %v738, 0
    %v924 = vsel %vm760, %v739, 0
    %v927 = vsel %vm760, %v740, 0
    %v930 = vsel %vm760, %v741, 0
    %v933 = vsel %vm760, %v742, 0
    %v936 = vsel %vm760, %v743, 0
    %v939 = vsel %vm760, %v744, 0
    %v942 = vsel %vm760, %v745, 0
    %v945 = vsel %vm760, %v746, 0
    %v948 = vsel %vm760, %v747, 0
    %v951 = vsel %vm760, %v748, 0
    %953 = vmatprep.subr.mxu0 0.0
    %954 = vmatpush1.msra.mxu0 %v749
    %955 = vmatprep.subr.mxu0 0.0
    %956 = vmatpush1.msra.mxu0 %v750
    %957 = vmatprep.subr.mxu0 0.0
    %958 = vmatpush1.msra.mxu0 %v751
    %959 = vmatprep.subr.mxu0 0.0
    %960 = vmatpush1.msra.mxu0 %v752
    %961 = vmatprep.subr.mxu0 0.0
    %962 = vmatpush1.msra.mxu0 0.0
    %963 = vmatprep.subr.mxu0 0.0
    %964 = vmatpush1.msra.mxu0 0.0
    %965 = vmatprep.subr.mxu0 0.0
    %966 = vmatpush1.msra.mxu0 0.0
    %967 = vmatprep.subr.mxu0 0.0
    %968 = vmatpush1.msra.mxu0 0.0
    %969 = vmatprep.subr.mxu0 0.0
    %970 = vmatpush1.msra.mxu0 0.0
    %971 = vmatprep.subr.mxu0 0.0
    %972 = vmatpush1.msra.mxu0 0.0
    %973 = vmatprep.subr.mxu0 0.0
    %974 = vmatpush1.msra.mxu0 0.0
    %975 = vmatprep.subr.mxu0 0.0
    %976 = vmatpush1.msra.mxu0 0.0
    %977 = vmatprep.subr.mxu0 0.0
    %978 = vmatpush1.msra.mxu0 0.0
    %979 = vmatprep.subr.mxu0 0.0
    %980 = vmatpush1.msra.mxu0 0.0
    %981 = vmatprep.subr.mxu0 0.0
    %982 = vmatpush1.msra.mxu0 0.0
    %983 = vmatprep.subr.mxu0 0.0
    %984 = vmatpush1.msra.mxu0 0.0
    %985 = vmatprep.subr.mxu0 0.0
    %986 = vmatpush1.msra.mxu0 0.0
    %987 = vmatprep.subr.mxu0 0.0
    %988 = vmatpush1.msra.mxu0 0.0
    %989 = vmatprep.subr.mxu0 0.0
    %990 = vmatpush1.msra.mxu0 0.0
    %991 = vmatprep.subr.mxu0 0.0
    %992 = vmatpush1.msra.mxu0 0.0
    %993 = vmatprep.subr.mxu0 0.0
    %994 = vmatpush1.msra.mxu0 0.0
    %995 = vmatprep.subr.mxu0 0.0
    %996 = vmatpush1.msra.mxu0 0.0
    %997 = vmatprep.subr.mxu0 0.0
    %998 = vmatpush1.msra.mxu0 0.0
    %999 = vmatprep.subr.mxu0 0.0
    %1000 = vmatpush1.msra.mxu0 0.0
    %1001 = vmatprep.subr.mxu0 0.0
    %1002 = vmatpush1.msra.mxu0 0.0
    %1003 = vmatprep.subr.mxu0 0.0
    %1004 = vmatpush1.msra.mxu0 0.0
    %1005 = vmatprep.subr.mxu0 0.0
    %1006 = vmatpush1.msra.mxu0 0.0
    %1007 = vmatprep.subr.mxu0 0.0
    %1008 = vmatpush1.msra.mxu0 0.0
    %1009 = vmatprep.subr.mxu0 0.0
    %1010 = vmatpush1.msra.mxu0 0.0
    %1011 = vmatprep.subr.mxu0 0.0
    %1012 = vmatpush1.msra.mxu0 0.0
    %1013 = vmatprep.subr.mxu0 0.0
    %1014 = vmatpush1.msra.mxu0 0.0
    %1015 = vmatprep.subr.mxu0 0.0
    %1016 = vmatpush1.msra.mxu0 0.0
    %1017 = vmatprep.mubr.f32.mxu0 0.0
    %1018 = vmatmul.mubr.f32.gmra.mrb[0].mxu0 %v762
    %v1019 = vpop.f32.mrb[0].mxu0
    %v1020 = vadd.f32 %v758, %v1019
    %v1021 = vpop.f32.mrb[0].mxu0
    %1022 = vmatprep.mubr.f32.mxu0 0.0
    %1023 = vmatmul.mubr.f32.gmra.mrb[0].mxu0 %v765
    %v1024 = vpop.f32.mrb[0].mxu0
    %v1025 = vadd.f32 %v758, %v1024
    %v1026 = vpop.f32.mrb[0].mxu0
    %1027 = vmatprep.mubr.f32.mxu0 0.0
    %1028 = vmatmul.mubr.f32.gmra.mrb[0].mxu0 %v768
    %v1029 = vpop.f32.mrb[0].mxu0
    %v1030 = vadd.f32 %v758, %v1029
    %v1031 = vpop.f32.mrb[0].mxu0
    %1032 = vmatprep.mubr.f32.mxu0 0.0
    %1033 = vmatmul.mubr.f32.gmra.mrb[0].mxu0 %v771
    %v1034 = vpop.f32.mrb[0].mxu0
    %v1035 = vadd.f32 %v758, %v1034
    %v1036 = vpop.f32.mrb[0].mxu0
    %1037 = vmatprep.mubr.f32.mxu0 0.0
    %1038 = vmatmul.mubr.f32.gmra.mrb[0].mxu0 %v774
    %v1039 = vpop.f32.mrb[0].mxu0
    %v1040 = vadd.f32 %v758, %v1039
    %v1041 = vpop.f32.mrb[0].mxu0
    %1042 = vmatprep.mubr.f32.mxu0 0.0
    %1043 = vmatmul.mubr.f32.gmra.mrb[0].mxu0 %v777
    %v1044 = vpop.f32.mrb[0].mxu0
    %v1045 = vadd.f32 %v758, %v1044
    %v1046 = vpop.f32.mrb[0].mxu0
    %1047 = vmatprep.mubr.f32.mxu0 0.0
    %1048 = vmatmul.mubr.f32.gmra.mrb[0].mxu0 %v780
    %v1049 = vpop.f32.mrb[0].mxu0
    %v1050 = vadd.f32 %v758, %v1049
    %v1051 = vpop.f32.mrb[0].mxu0
    %1052 = vmatprep.mubr.f32.mxu0 0.0
    %1053 = vmatmul.mubr.f32.gmra.mrb[0].mxu0 %v783
    %v1054 = vpop.f32.mrb[0].mxu0
    %v1055 = vadd.f32 %v758, %v1054
    %v1056 = vpop.f32.mrb[0].mxu0
    %1057 = vmatprep.mubr.f32.mxu0 0.0
    %1058 = vmatmul.mubr.f32.gmra.mrb[0].mxu0 %v786
    %v1059 = vpop.f32.mrb[0].mxu0
    %v1060 = vadd.f32 %v758, %v1059
    %v1061 = vpop.f32.mrb[0].mxu0
    %1062 = vmatprep.mubr.f32.mxu0 0.0
    %1063 = vmatmul.mubr.f32.gmra.mrb[0].mxu0 %v789
    %v1064 = vpop.f32.mrb[0].mxu0
    %v1065 = vadd.f32 %v758, %v1064
    %v1066 = vpop.f32.mrb[0].mxu0
    %1067 = vmatprep.mubr.f32.mxu0 0.0
    %1068 = vmatmul.mubr.f32.gmra.mrb[0].mxu0 %v792
    %v1069 = vpop.f32.mrb[0].mxu0
    %v1070 = vadd.f32 %v758, %v1069
    %v1071 = vpop.f32.mrb[0].mxu0
    %1072 = vmatprep.mubr.f32.mxu0 0.0
    %1073 = vmatmul.mubr.f32.gmra.mrb[0].mxu0 %v795
    %v1074 = vpop.f32.mrb[0].mxu0
    %v1075 = vadd.f32 %v758, %v1074
    %v1076 = vpop.f32.mrb[0].mxu0
    %1077 = vmatprep.mubr.f32.mxu0 0.0
    %1078 = vmatmul.mubr.f32.gmra.mrb[0].mxu0 %v798
    %v1079 = vpop.f32.mrb[0].mxu0
    %v1080 = vadd.f32 %v758, %v1079
    %v1081 = vpop.f32.mrb[0].mxu0
    %1082 = vmatprep.mubr.f32.mxu0 0.0
    %1083 = vmatmul.mubr.f32.gmra.mrb[0].mxu0 %v801
    %v1084 = vpop.f32.mrb[0].mxu0
    %v1085 = vadd.f32 %v758, %v1084
    %v1086 = vpop.f32.mrb[0].mxu0
    %1087 = vmatprep.mubr.f32.mxu0 0.0
    %1088 = vmatmul.mubr.f32.gmra.mrb[0].mxu0 %v804
    %v1089 = vpop.f32.mrb[0].mxu0
    %v1090 = vadd.f32 %v758, %v1089
    %v1091 = vpop.f32.mrb[0].mxu0
    %1092 = vmatprep.mubr.f32.mxu0 0.0
    %1093 = vmatmul.mubr.f32.gmra.mrb[0].mxu0 %v807
    %v1094 = vpop.f32.mrb[0].mxu0
    %v1095 = vadd.f32 %v758, %v1094
    %v1096 = vpop.f32.mrb[0].mxu0
    %1097 = vmatprep.mubr.f32.mxu0 0.0
    %1098 = vmatmul.mubr.f32.gmra.mrb[0].mxu0 %v810
    %v1099 = vpop.f32.mrb[0].mxu0
    %v1100 = vadd.f32 %v758, %v1099
    %v1101 = vpop.f32.mrb[0].mxu0
    %1102 = vmatprep.mubr.f32.mxu0 0.0
    %1103 = vmatmul.mubr.f32.gmra.mrb[0].mxu0 %v813
    %v1104 = vpop.f32.mrb[0].mxu0
    %v1105 = vadd.f32 %v758, %v1104
    %v1106 = vpop.f32.mrb[0].mxu0
    %1107 = vmatprep.mubr.f32.mxu0 0.0
    %1108 = vmatmul.mubr.f32.gmra.mrb[0].mxu0 %v816
    %v1109 = vpop.f32.mrb[0].mxu0
    %v1110 = vadd.f32 %v758, %v1109
    %v1111 = vpop.f32.mrb[0].mxu0
    %1112 = vmatprep.mubr.f32.mxu0 0.0
    %1113 = vmatmul.mubr.f32.gmra.mrb[0].mxu0 %v819
    %v1114 = vpop.f32.mrb[0].mxu0
    %v1115 = vadd.f32 %v758, %v1114
    %v1116 = vpop.f32.mrb[0].mxu0
    %1117 = vmatprep.mubr.f32.mxu0 0.0
    %1118 = vmatmul.mubr.f32.gmra.mrb[0].mxu0 %v822
    %v1119 = vpop.f32.mrb[0].mxu0
    %v1120 = vadd.f32 %v758, %v1119
    %v1121 = vpop.f32.mrb[0].mxu0
    %1122 = vmatprep.mubr.f32.mxu0 0.0
    %1123 = vmatmul.mubr.f32.gmra.mrb[0].mxu0 %v825
    %v1124 = vpop.f32.mrb[0].mxu0
    %v1125 = vadd.f32 %v758, %v1124
    %v1126 = vpop.f32.mrb[0].mxu0
    %1127 = vmatprep.mubr.f32.mxu0 0.0
    %1128 = vmatmul.mubr.f32.gmra.mrb[0].mxu0 %v828
    %v1129 = vpop.f32.mrb[0].mxu0
    %v1130 = vadd.f32 %v758, %v1129
    %v1131 = vpop.f32.mrb[0].mxu0
    %1132 = vmatprep.mubr.f32.mxu0 0.0
    %1133 = vmatmul.mubr.f32.gmra.mrb[0].mxu0 %v831
    %v1134 = vpop.f32.mrb[0].mxu0
    %v1135 = vadd.f32 %v758, %v1134
    %v1136 = vpop.f32.mrb[0].mxu0
    %1137 = vmatprep.mubr.f32.mxu0 0.0
    %1138 = vmatmul.mubr.f32.gmra.mrb[0].mxu0 %v834
    %v1139 = vpop.f32.mrb[0].mxu0
    %v1140 = vadd.f32 %v758, %v1139
    %v1141 = vpop.f32.mrb[0].mxu0
    %1142 = vmatprep.mubr.f32.mxu0 0.0
    %1143 = vmatmul.mubr.f32.gmra.mrb[0].mxu0 %v837
    %v1144 = vpop.f32.mrb[0].mxu0
    %v1145 = vadd.f32 %v758, %v1144
    %v1146 = vpop.f32.mrb[0].mxu0
    %1147 = vmatprep.mubr.f32.mxu0 0.0
    %1148 = vmatmul.mubr.f32.gmra.mrb[0].mxu0 %v840
    %v1149 = vpop.f32.mrb[0].mxu0
    %v1150 = vadd.f32 %v758, %v1149
    %v1151 = vpop.f32.mrb[0].mxu0
    %1152 = vmatprep.mubr.f32.mxu0 0.0
    %1153 = vmatmul.mubr.f32.gmra.mrb[0].mxu0 %v843
    %v1154 = vpop.f32.mrb[0].mxu0
    %v1155 = vadd.f32 %v758, %v1154
    %v1156 = vpop.f32.mrb[0].mxu0
    %1157 = vmatprep.mubr.f32.mxu0 0.0
    %1158 = vmatmul.mubr.f32.gmra.mrb[0].mxu0 %v846
    %v1159 = vpop.f32.mrb[0].mxu0
    %v1160 = vadd.f32 %v758, %v1159
    %v1161 = vpop.f32.mrb[0].mxu0
    %1162 = vmatprep.mubr.f32.mxu0 0.0
    %1163 = vmatmul.mubr.f32.gmra.mrb[0].mxu0 %v849
    %v1164 = vpop.f32.mrb[0].mxu0
    %v1165 = vadd.f32 %v758, %v1164
    %v1166 = vpop.f32.mrb[0].mxu0
    %1167 = vmatprep.mubr.f32.mxu0 0.0
    %1168 = vmatmul.mubr.f32.gmra.mrb[0].mxu0 %v852
    %v1169 = vpop.f32.mrb[0].mxu0
    %v1170 = vadd.f32 %v758, %v1169
    %v1171 = vpop.f32.mrb[0].mxu0
    %1172 = vmatprep.mubr.f32.mxu0 0.0
    %1173 = vmatmul.mubr.f32.gmra.mrb[0].mxu0 %v855
    %v1174 = vpop.f32.mrb[0].mxu0
    %v1175 = vadd.f32 %v758, %v1174
    %v1176 = vpop.f32.mrb[0].mxu0
    %1177 = vmatprep.mubr.f32.mxu0 0.0
    %1178 = vmatmul.mubr.f32.gmra.mrb[0].mxu0 %v858
    %v1179 = vpop.f32.mrb[0].mxu0
    %v1180 = vadd.f32 %v758, %v1179
    %v1181 = vpop.f32.mrb[0].mxu0
    %1182 = vmatprep.mubr.f32.mxu0 0.0
    %1183 = vmatmul.mubr.f32.gmra.mrb[0].mxu0 %v861
    %v1184 = vpop.f32.mrb[0].mxu0
    %v1185 = vadd.f32 %v758, %v1184
    %v1186 = vpop.f32.mrb[0].mxu0
    %1187 = vmatprep.mubr.f32.mxu0 0.0
    %1188 = vmatmul.mubr.f32.gmra.mrb[0].mxu0 %v864
    %v1189 = vpop.f32.mrb[0].mxu0
    %v1190 = vadd.f32 %v758, %v1189
    %v1191 = vpop.f32.mrb[0].mxu0
    %1192 = vmatprep.mubr.f32.mxu0 0.0
    %1193 = vmatmul.mubr.f32.gmra.mrb[0].mxu0 %v867
    %v1194 = vpop.f32.mrb[0].mxu0
    %v1195 = vadd.f32 %v758, %v1194
    %v1196 = vpop.f32.mrb[0].mxu0
    %1197 = vmatprep.mubr.f32.mxu0 0.0
    %1198 = vmatmul.mubr.f32.gmra.mrb[0].mxu0 %v870
    %v1199 = vpop.f32.mrb[0].mxu0
    %v1200 = vadd.f32 %v758, %v1199
    %v1201 = vpop.f32.mrb[0].mxu0
    %1202 = vmatprep.mubr.f32.mxu0 0.0
    %1203 = vmatmul.mubr.f32.gmra.mrb[0].mxu0 %v873
    %v1204 = vpop.f32.mrb[0].mxu0
    %v1205 = vadd.f32 %v758, %v1204
    %v1206 = vpop.f32.mrb[0].mxu0
    %1207 = vmatprep.mubr.f32.mxu0 0.0
    %1208 = vmatmul.mubr.f32.gmra.mrb[0].mxu0 %v876
    %v1209 = vpop.f32.mrb[0].mxu0
    %v1210 = vadd.f32 %v758, %v1209
    %v1211 = vpop.f32.mrb[0].mxu0
    %1212 = vmatprep.mubr.f32.mxu0 0.0
    %1213 = vmatmul.mubr.f32.gmra.mrb[0].mxu0 %v879
    %v1214 = vpop.f32.mrb[0].mxu0
    %v1215 = vadd.f32 %v758, %v1214
    %v1216 = vpop.f32.mrb[0].mxu0
    %1217 = vmatprep.mubr.f32.mxu0 0.0
    %1218 = vmatmul.mubr.f32.gmra.mrb[0].mxu0 %v882
    %v1219 = vpop.f32.mrb[0].mxu0
    %v1220 = vadd.f32 %v758, %v1219
    %v1221 = vpop.f32.mrb[0].mxu0
    %1222 = vmatprep.mubr.f32.mxu0 0.0
    %1223 = vmatmul.mubr.f32.gmra.mrb[0].mxu0 %v885
    %v1224 = vpop.f32.mrb[0].mxu0
    %v1225 = vadd.f32 %v758, %v1224
    %v1226 = vpop.f32.mrb[0].mxu0
    %1227 = vmatprep.mubr.f32.mxu0 0.0
    %1228 = vmatmul.mubr.f32.gmra.mrb[0].mxu0 %v888
    %v1229 = vpop.f32.mrb[0].mxu0
    %v1230 = vadd.f32 %v758, %v1229
    %v1231 = vpop.f32.mrb[0].mxu0
    %1232 = vmatprep.mubr.f32.mxu0 0.0
    %1233 = vmatmul.mubr.f32.gmra.mrb[0].mxu0 %v891
    %v1234 = vpop.f32.mrb[0].mxu0
    %v1235 = vadd.f32 %v758, %v1234
    %v1236 = vpop.f32.mrb[0].mxu0
    %1237 = vmatprep.mubr.f32.mxu0 0.0
    %1238 = vmatmul.mubr.f32.gmra.mrb[0].mxu0 %v894
    %v1239 = vpop.f32.mrb[0].mxu0
    %v1240 = vadd.f32 %v758, %v1239
    %v1241 = vpop.f32.mrb[0].mxu0
    %1242 = vmatprep.mubr.f32.mxu0 0.0
    %1243 = vmatmul.mubr.f32.gmra.mrb[0].mxu0 %v897
    %v1244 = vpop.f32.mrb[0].mxu0
    %v1245 = vadd.f32 %v758, %v1244
    %v1246 = vpop.f32.mrb[0].mxu0
    %1247 = vmatprep.mubr.f32.mxu0 0.0
    %1248 = vmatmul.mubr.f32.gmra.mrb[0].mxu0 %v900
    %v1249 = vpop.f32.mrb[0].mxu0
    %v1250 = vadd.f32 %v758, %v1249
    %v1251 = vpop.f32.mrb[0].mxu0
    %1252 = vmatprep.mubr.f32.mxu0 0.0
    %1253 = vmatmul.mubr.f32.gmra.mrb[0].mxu0 %v903
    %v1254 = vpop.f32.mrb[0].mxu0
    %v1255 = vadd.f32 %v758, %v1254
    %v1256 = vpop.f32.mrb[0].mxu0
    %1257 = vmatprep.mubr.f32.mxu0 0.0
    %1258 = vmatmul.mubr.f32.gmra.mrb[0].mxu0 %v906
    %v1259 = vpop.f32.mrb[0].mxu0
    %v1260 = vadd.f32 %v758, %v1259
    %v1261 = vpop.f32.mrb[0].mxu0
    %1262 = vmatprep.mubr.f32.mxu0 0.0
    %1263 = vmatmul.mubr.f32.gmra.mrb[0].mxu0 %v909
    %v1264 = vpop.f32.mrb[0].mxu0
    %v1265 = vadd.f32 %v758, %v1264
    %v1266 = vpop.f32.mrb[0].mxu0
    %1267 = vmatprep.mubr.f32.mxu0 0.0
    %1268 = vmatmul.mubr.f32.gmra.mrb[0].mxu0 %v912
    %v1269 = vpop.f32.mrb[0].mxu0
    %v1270 = vadd.f32 %v758, %v1269
    %v1271 = vpop.f32.mrb[0].mxu0
    %1272 = vmatprep.mubr.f32.mxu0 0.0
    %1273 = vmatmul.mubr.f32.gmra.mrb[0].mxu0 %v915
    %v1274 = vpop.f32.mrb[0].mxu0
    %v1275 = vadd.f32 %v758, %v1274
    %v1276 = vpop.f32.mrb[0].mxu0
    %1277 = vmatprep.mubr.f32.mxu0 0.0
    %1278 = vmatmul.mubr.f32.gmra.mrb[0].mxu0 %v918
    %v1279 = vpop.f32.mrb[0].mxu0
    %v1280 = vadd.f32 %v758, %v1279
    %v1281 = vpop.f32.mrb[0].mxu0
    %1282 = vmatprep.mubr.f32.mxu0 0.0
    %1283 = vmatmul.mubr.f32.gmra.mrb[0].mxu0 %v921
    %v1284 = vpop.f32.mrb[0].mxu0
    %v1285 = vadd.f32 %v758, %v1284
    %v1286 = vpop.f32.mrb[0].mxu0
    %1287 = vmatprep.mubr.f32.mxu0 0.0
    %1288 = vmatmul.mubr.f32.gmra.mrb[0].mxu0 %v924
    %v1289 = vpop.f32.mrb[0].mxu0
    %v1290 = vadd.f32 %v758, %v1289
    %v1291 = vpop.f32.mrb[0].mxu0
    %1292 = vmatprep.mubr.f32.mxu0 0.0
    %1293 = vmatmul.mubr.f32.gmra.mrb[0].mxu0 %v927
    %v1294 = vpop.f32.mrb[0].mxu0
    %v1295 = vadd.f32 %v758, %v1294
    %v1296 = vpop.f32.mrb[0].mxu0
    %1297 = vmatprep.mubr.f32.mxu0 0.0
    %1298 = vmatmul.mubr.f32.gmra.mrb[0].mxu0 %v930
    %v1299 = vpop.f32.mrb[0].mxu0
    %v1300 = vadd.f32 %v758, %v1299
    %v1301 = vpop.f32.mrb[0].mxu0
    %1302 = vmatprep.mubr.f32.mxu0 0.0
    %1303 = vmatmul.mubr.f32.gmra.mrb[0].mxu0 %v933
    %v1304 = vpop.f32.mrb[0].mxu0
    %v1305 = vadd.f32 %v758, %v1304
    %v1306 = vpop.f32.mrb[0].mxu0
    %1307 = vmatprep.mubr.f32.mxu0 0.0
    %1308 = vmatmul.mubr.f32.gmra.mrb[0].mxu0 %v936
    %v1309 = vpop.f32.mrb[0].mxu0
    %v1310 = vadd.f32 %v758, %v1309
    %v1311 = vpop.f32.mrb[0].mxu0
    %1312 = vmatprep.mubr.f32.mxu0 0.0
    %1313 = vmatmul.mubr.f32.gmra.mrb[0].mxu0 %v939
    %v1314 = vpop.f32.mrb[0].mxu0
    %v1315 = vadd.f32 %v758, %v1314
    %v1316 = vpop.f32.mrb[0].mxu0
    %1317 = vmatprep.mubr.f32.mxu0 0.0
    %1318 = vmatmul.mubr.f32.gmra.mrb[0].mxu0 %v942
    %v1319 = vpop.f32.mrb[0].mxu0
    %v1320 = vadd.f32 %v758, %v1319
    %v1321 = vpop.f32.mrb[0].mxu0
    %1322 = vmatprep.mubr.f32.mxu0 0.0
    %1323 = vmatmul.mubr.f32.gmra.mrb[0].mxu0 %v945
    %v1324 = vpop.f32.mrb[0].mxu0
    %v1325 = vadd.f32 %v758, %v1324
    %v1326 = vpop.f32.mrb[0].mxu0
    %1327 = vmatprep.mubr.f32.mxu0 0.0
    %1328 = vmatmul.mubr.f32.gmra.mrb[0].mxu0 %v948
    %v1329 = vpop.f32.mrb[0].mxu0
    %v1330 = vadd.f32 %v758, %v1329
    %v1331 = vpop.f32.mrb[0].mxu0
    %1332 = vmatprep.mubr.f32.mxu0 0.0
    %1333 = vmatmul.mubr.f32.gmra.mrb[0].mxu0 %v951
    %v1334 = vpop.f32.mrb[0].mxu0
    %v1335 = vadd.f32 %v758, %v1334
    %v1336 = vpop.f32.mrb[0].mxu0
    %1337 = vdwg.mxu0
    %v1338 = vmax.f32 %v1020, 0.0
    %v1339 = vmax.f32 %v1025, 0.0
    %v1340 = vmax.f32 %v1030, 0.0
    %v1341 = vmax.f32 %v1035, 0.0
    %v1342 = vmax.f32 %v1040, 0.0
    %v1343 = vmax.f32 %v1045, 0.0
    %v1344 = vmax.f32 %v1050, 0.0
    %v1345 = vmax.f32 %v1055, 0.0
    %v1346 = vmax.f32 %v1060, 0.0
    %v1347 = vmax.f32 %v1065, 0.0
    %v1348 = vmax.f32 %v1070, 0.0
    %v1349 = vmax.f32 %v1075, 0.0
    %v1350 = vmax.f32 %v1080, 0.0
    %v1351 = vmax.f32 %v1085, 0.0
    %v1352 = vmax.f32 %v1090, 0.0
    %v1353 = vmax.f32 %v1095, 0.0
    %v1354 = vmax.f32 %v1100, 0.0
    %v1355 = vmax.f32 %v1105, 0.0
    %v1356 = vmax.f32 %v1110, 0.0
    %v1357 = vmax.f32 %v1115, 0.0
    %v1358 = vmax.f32 %v1120, 0.0
    %v1359 = vmax.f32 %v1125, 0.0
    %v1360 = vmax.f32 %v1130, 0.0
    %v1361 = vmax.f32 %v1135, 0.0
    %v1362 = vmax.f32 %v1140, 0.0
    %v1363 = vmax.f32 %v1145, 0.0
    %v1364 = vmax.f32 %v1150, 0.0
    %v1365 = vmax.f32 %v1155, 0.0
    %v1366 = vmax.f32 %v1160, 0.0
    %v1367 = vmax.f32 %v1165, 0.0
    %v1368 = vmax.f32 %v1170, 0.0
    %v1369 = vmax.f32 %v1175, 0.0
    %v1370 = vmax.f32 %v1180, 0.0
    %v1371 = vmax.f32 %v1185, 0.0
    %v1372 = vmax.f32 %v1190, 0.0
    %v1373 = vmax.f32 %v1195, 0.0
    %v1374 = vmax.f32 %v1200, 0.0
    %v1375 = vmax.f32 %v1205, 0.0
    %v1376 = vmax.f32 %v1210, 0.0
    %v1377 = vmax.f32 %v1215, 0.0
    %v1378 = vmax.f32 %v1220, 0.0
    %v1379 = vmax.f32 %v1225, 0.0
    %v1380 = vmax.f32 %v1230, 0.0
    %v1381 = vmax.f32 %v1235, 0.0
    %v1382 = vmax.f32 %v1240, 0.0
    %v1383 = vmax.f32 %v1245, 0.0
    %v1384 = vmax.f32 %v1250, 0.0
    %v1385 = vmax.f32 %v1255, 0.0
    %v1386 = vmax.f32 %v1260, 0.0
    %v1387 = vmax.f32 %v1265, 0.0
    %v1388 = vmax.f32 %v1270, 0.0
    %v1389 = vmax.f32 %v1275, 0.0
    %v1390 = vmax.f32 %v1280, 0.0
    %v1391 = vmax.f32 %v1285, 0.0
    %v1392 = vmax.f32 %v1290, 0.0
    %v1393 = vmax.f32 %v1295, 0.0
    %v1394 = vmax.f32 %v1300, 0.0
    %v1395 = vmax.f32 %v1305, 0.0
    %v1396 = vmax.f32 %v1310, 0.0
    %v1397 = vmax.f32 %v1315, 0.0
    %v1398 = vmax.f32 %v1320, 0.0
    %v1399 = vmax.f32 %v1325, 0.0
    %v1400 = vmax.f32 %v1330, 0.0
    %v1401 = vmax.f32 %v1335, 0.0
    %v1402 = vsel %vm760, %v1338, 0.0
    %v1403 = vsel %vm760, %v1339, 0.0
    %v1404 = vadd.f32 %v1402, %v1403
    %v1405 = vsel %vm760, %v1340, 0.0
    %v1406 = vadd.f32 %v1404, %v1405
    %v1407 = vsel %vm760, %v1341, 0.0
    %v1408 = vadd.f32 %v1406, %v1407
    %v1409 = vsel %vm760, %v1342, 0.0
    %v1410 = vadd.f32 %v1408, %v1409
    %v1411 = vsel %vm760, %v1343, 0.0
    %v1412 = vadd.f32 %v1410, %v1411
    %v1413 = vsel %vm760, %v1344, 0.0
    %v1414 = vadd.f32 %v1412, %v1413
    %v1415 = vsel %vm760, %v1345, 0.0
    %v1416 = vadd.f32 %v1414, %v1415
    %v1417 = vsel %vm760, %v1346, 0.0
    %v1418 = vadd.f32 %v1416, %v1417
    %v1419 = vsel %vm760, %v1347, 0.0
    %v1420 = vadd.f32 %v1418, %v1419
    %v1421 = vsel %vm760, %v1348, 0.0
    %v1422 = vadd.f32 %v1420, %v1421
    %v1423 = vsel %vm760, %v1349, 0.0
    %v1424 = vadd.f32 %v1422, %v1423
    %v1425 = vsel %vm760, %v1350, 0.0
    %v1426 = vadd.f32 %v1424, %v1425
    %v1427 = vsel %vm760, %v1351, 0.0
    %v1428 = vadd.f32 %v1426, %v1427
    %v1429 = vsel %vm760, %v1352, 0.0
    %v1430 = vadd.f32 %v1428, %v1429
    %v1431 = vsel %vm760, %v1353, 0.0
    %v1432 = vadd.f32 %v1430, %v1431
    %v1433 = vsel %vm760, %v1354, 0.0
    %v1434 = vadd.f32 %v1432, %v1433
    %v1435 = vsel %vm760, %v1355, 0.0
    %v1436 = vadd.f32 %v1434, %v1435
    %v1437 = vsel %vm760, %v1356, 0.0
    %v1438 = vadd.f32 %v1436, %v1437
    %v1439 = vsel %vm760, %v1357, 0.0
    %v1440 = vadd.f32 %v1438, %v1439
    %v1441 = vsel %vm760, %v1358, 0.0
    %v1442 = vadd.f32 %v1440, %v1441
    %v1443 = vsel %vm760, %v1359, 0.0
    %v1444 = vadd.f32 %v1442, %v1443
    %v1445 = vsel %vm760, %v1360, 0.0
    %v1446 = vadd.f32 %v1444, %v1445
    %v1447 = vsel %vm760, %v1361, 0.0
    %v1448 = vadd.f32 %v1446, %v1447
    %v1449 = vsel %vm760, %v1362, 0.0
    %v1450 = vadd.f32 %v1448, %v1449
    %v1451 = vsel %vm760, %v1363, 0.0
    %v1452 = vadd.f32 %v1450, %v1451
    %v1453 = vsel %vm760, %v1364, 0.0
    %v1454 = vadd.f32 %v1452, %v1453
    %v1455 = vsel %vm760, %v1365, 0.0
    %v1456 = vadd.f32 %v1454, %v1455
    %v1457 = vsel %vm760, %v1366, 0.0
    %v1458 = vadd.f32 %v1456, %v1457
    %v1459 = vsel %vm760, %v1367, 0.0
    %v1460 = vadd.f32 %v1458, %v1459
    %v1461 = vsel %vm760, %v1368, 0.0
    %v1462 = vadd.f32 %v1460, %v1461
    %v1463 = vsel %vm760, %v1369, 0.0
    %v1464 = vadd.f32 %v1462, %v1463
    %v1465 = vrot.slane %v1464, 4
    %v1466 = vadd.f32 %v1464, %v1465
    %v1467 = vrot.slane %v1466, 2
    %v1468 = vadd.f32 %v1466, %v1467
    %v1469 = vrot.slane %v1468, 1
    %v1470 = vadd.f32 %v1468, %v1469
    %v1471 = vsel %vm760, %v1370, 0.0
    %v1472 = vsel %vm760, %v1371, 0.0
    %v1473 = vadd.f32 %v1471, %v1472
    %v1474 = vsel %vm760, %v1372, 0.0
    %v1475 = vadd.f32 %v1473, %v1474
    %v1476 = vsel %vm760, %v1373, 0.0
    %v1477 = vadd.f32 %v1475, %v1476
    %v1478 = vsel %vm760, %v1374, 0.0
    %v1479 = vadd.f32 %v1477, %v1478
    %v1480 = vsel %vm760, %v1375, 0.0
    %v1481 = vadd.f32 %v1479, %v1480
    %v1482 = vsel %vm760, %v1376, 0.0
    %v1483 = vadd.f32 %v1481, %v1482
    %v1484 = vsel %vm760, %v1377, 0.0
    %v1485 = vadd.f32 %v1483, %v1484
    %v1486 = vsel %vm760, %v1378, 0.0
    %v1487 = vadd.f32 %v1485, %v1486
    %v1488 = vsel %vm760, %v1379, 0.0
    %v1489 = vadd.f32 %v1487, %v1488
    %v1490 = vsel %vm760, %v1380, 0.0
    %v1491 = vadd.f32 %v1489, %v1490
    %v1492 = vsel %vm760, %v1381, 0.0
    %v1493 = vadd.f32 %v1491, %v1492
    %v1494 = vsel %vm760, %v1382, 0.0
    %v1495 = vadd.f32 %v1493, %v1494
    %v1496 = vsel %vm760, %v1383, 0.0
    %v1497 = vadd.f32 %v1495, %v1496
    %v1498 = vsel %vm760, %v1384, 0.0
    %v1499 = vadd.f32 %v1497, %v1498
    %v1500 = vsel %vm760, %v1385, 0.0
    %v1501 = vadd.f32 %v1499, %v1500
    %v1502 = vsel %vm760, %v1386, 0.0
    %v1503 = vadd.f32 %v1501, %v1502
    %v1504 = vsel %vm760, %v1387, 0.0
    %v1505 = vadd.f32 %v1503, %v1504
    %v1506 = vsel %vm760, %v1388, 0.0
    %v1507 = vadd.f32 %v1505, %v1506
    %v1508 = vsel %vm760, %v1389, 0.0
    %v1509 = vadd.f32 %v1507, %v1508
    %v1510 = vsel %vm760, %v1390, 0.0
    %v1511 = vadd.f32 %v1509, %v1510
    %v1512 = vsel %vm760, %v1391, 0.0
    %v1513 = vadd.f32 %v1511, %v1512
    %v1514 = vsel %vm760, %v1392, 0.0
    %v1515 = vadd.f32 %v1513, %v1514
    %v1516 = vsel %vm760, %v1393, 0.0
    %v1517 = vadd.f32 %v1515, %v1516
    %v1518 = vsel %vm760, %v1394, 0.0
    %v1519 = vadd.f32 %v1517, %v1518
    %v1520 = vsel %vm760, %v1395, 0.0
    %v1521 = vadd.f32 %v1519, %v1520
    %v1522 = vsel %vm760, %v1396, 0.0
    %v1523 = vadd.f32 %v1521, %v1522
    %v1524 = vsel %vm760, %v1397, 0.0
    %v1525 = vadd.f32 %v1523, %v1524
    %v1526 = vsel %vm760, %v1398, 0.0
    %v1527 = vadd.f32 %v1525, %v1526
    %v1528 = vsel %vm760, %v1399, 0.0
    %v1529 = vadd.f32 %v1527, %v1528
    %v1530 = vsel %vm760, %v1400, 0.0
    %v1531 = vadd.f32 %v1529, %v1530
    %v1532 = vsel %vm760, %v1401, 0.0
    %v1533 = vadd.f32 %v1531, %v1532
    %v1534 = vrot.slane %v1533, 4
    %v1535 = vadd.f32 %v1533, %v1534
    %v1536 = vrot.slane %v1535, 2
    %v1537 = vadd.f32 %v1535, %v1536
    %v1538 = vrot.slane %v1537, 1
    %v1539 = vadd.f32 %v1537, %v1538
    %v1540 = vld [vmem:[%s5] sm:$0xff]
    %v1541 = vld [vmem:[%s5 + $0x8] sm:$0xff]
    %v1542 = vld [vmem:[%s5 + $0x10] sm:$0xff]
    %v1543 = vld [vmem:[%s5 + $0x18] sm:$0xff]
    %v1544 = vld [vmem:[%s6] sm:$0x1]
    %v1546 = vlaneseq
    %v1547 = vshrl.u32 %v1546, 7
    %v1548 = vsub.s32 0, %v1547
    %v1549 = vrot.slane %v1544, %v1548
    %vm1553 = vcmask 1041409
    %v1554 = vsel %vm1553, %v1539, %v1470
    %v1555 = vsel %vm760, %v1554, 0
    %1557 = vmatprep.subr.mxu0 0.0
    %1558 = vmatpush1.msra.mxu0 %v1540
    %1559 = vmatprep.subr.mxu0 0.0
    %1560 = vmatpush1.msra.mxu0 %v1541
    %1561 = vmatprep.subr.mxu0 0.0
    %1562 = vmatpush1.msra.mxu0 %v1542
    %1563 = vmatprep.subr.mxu0 0.0
    %1564 = vmatpush1.msra.mxu0 %v1543
    %1565 = vmatprep.subr.mxu0 0.0
    %1566 = vmatpush1.msra.mxu0 0.0
    %1567 = vmatprep.subr.mxu0 0.0
    %1568 = vmatpush1.msra.mxu0 0.0
    %1569 = vmatprep.subr.mxu0 0.0
    %1570 = vmatpush1.msra.mxu0 0.0
    %1571 = vmatprep.subr.mxu0 0.0
    %1572 = vmatpush1.msra.mxu0 0.0
    %1573 = vmatprep.subr.mxu0 0.0
    %1574 = vmatpush1.msra.mxu0 0.0
    %1575 = vmatprep.subr.mxu0 0.0
    %1576 = vmatpush1.msra.mxu0 0.0
    %1577 = vmatprep.subr.mxu0 0.0
    %1578 = vmatpush1.msra.mxu0 0.0
    %1579 = vmatprep.subr.mxu0 0.0
    %1580 = vmatpush1.msra.mxu0 0.0
    %1581 = vmatprep.subr.mxu0 0.0
    %1582 = vmatpush1.msra.mxu0 0.0
    %1583 = vmatprep.subr.mxu0 0.0
    %1584 = vmatpush1.msra.mxu0 0.0
    %1585 = vmatprep.subr.mxu0 0.0
    %1586 = vmatpush1.msra.mxu0 0.0
    %1587 = vmatprep.subr.mxu0 0.0
    %1588 = vmatpush1.msra.mxu0 0.0
    %1589 = vmatprep.subr.mxu0 0.0
    %1590 = vmatpush1.msra.mxu0 0.0
    %1591 = vmatprep.subr.mxu0 0.0
    %1592 = vmatpush1.msra.mxu0 0.0
    %1593 = vmatprep.subr.mxu0 0.0
    %1594 = vmatpush1.msra.mxu0 0.0
    %1595 = vmatprep.subr.mxu0 0.0
    %1596 = vmatpush1.msra.mxu0 0.0
    %1597 = vmatprep.subr.mxu0 0.0
    %1598 = vmatpush1.msra.mxu0 0.0
    %1599 = vmatprep.subr.mxu0 0.0
    %1600 = vmatpush1.msra.mxu0 0.0
    %1601 = vmatprep.subr.mxu0 0.0
    %1602 = vmatpush1.msra.mxu0 0.0
    %1603 = vmatprep.subr.mxu0 0.0
    %1604 = vmatpush1.msra.mxu0 0.0
    %1605 = vmatprep.subr.mxu0 0.0
    %1606 = vmatpush1.msra.mxu0 0.0
    %1607 = vmatprep.subr.mxu0 0.0
    %1608 = vmatpush1.msra.mxu0 0.0
    %1609 = vmatprep.subr.mxu0 0.0
    %1610 = vmatpush1.msra.mxu0 0.0
    %1611 = vmatprep.subr.mxu0 0.0
    %1612 = vmatpush1.msra.mxu0 0.0
    %1613 = vmatprep.subr.mxu0 0.0
    %1614 = vmatpush1.msra.mxu0 0.0
    %1615 = vmatprep.subr.mxu0 0.0
    %1616 = vmatpush1.msra.mxu0 0.0
    %1617 = vmatprep.subr.mxu0 0.0
    %1618 = vmatpush1.msra.mxu0 0.0
    %1619 = vmatprep.subr.mxu0 0.0
    %1620 = vmatpush1.msra.mxu0 0.0
    %1621 = vmatprep.mubr.f32.mxu0 0.0
    %1622 = vmatmul.mubr.f32.gmra.mrb[0].mxu0 %v1555
    %v1623 = vpop.f32.mrb[0].mxu0
    %v1624 = vadd.f32 %v1549, %v1623
    %v1625 = vpop.f32.mrb[0].mxu0
    %1626 = vdwg.mxu0
    %vm1627 = vcmask 74752
    %1628 = vst.msk [vmem:[#allocation2] sm:$0x3] %vm1627, %v1624
    // Predicated region
    $region30: #{model_framer_forward.1} parent=1 // pred_check
      _
    $region31: #{model_framer_forward.1} parent=1 // pred_check_branch
      %1630 = sbr.rel (0) target = $region33
    $region32: #{model_framer_forward.1} parent=1 // pred_region
      %s1632 = ssub.s32 32, 32
      %1633 = vsyncadd [#allocation3], %s1632
      %s1635 = sshll.u32 [#allocation2], 4
      %s1636 = int_to_ptr.vmem [resolvable:$true] %s1635
      %1638 = dma.vmem_to_hbm [thread:$0]  %s1636, 32, %s7, [#allocation3]
    $region33: #{model_framer_forward.1} parent=1 // pred_fallthru
      _
    // Predicated region
    $region34: #{model_framer_forward.1} parent=1 // pred_check
      _
    $region35: #{model_framer_forward.1} parent=1 // pred_check_branch
      %1640 = sbr.rel (0) target = $region37
    $region36: #{model_framer_forward.1} parent=1 // pred_region
      %1641 = dma.done [#allocation3], 32
    $region37: #{model_framer_forward.1} parent=1 // pred_fallthru
      _
    %1642 = vsyncpa [#allocation3], 1

</llo_original>
